<compile_context>
chip_gen: v5e
topology: v5e:2x2
jax: 0.10.0
libtpu: 0.0.40
codegen_flags: <defaults>
</compile_context>

<pallas_src>
import functools

import jax
import jax.numpy as jnp
from jax.experimental import pallas as pl
from jax.experimental.pallas import tpu as pltpu

_LANE = 128


def _round_up(v: int, m: int) -> int:
    return ((v + m - 1) // m) * m


def _pad2d(x, rows: int, cols: int):
    return jnp.pad(x, ((0, rows - x.shape[0]), (0, cols - x.shape[1])))


def _pick_tile(dim: int, target: int) -> int:
    """Largest multiple of 128 that is <= target and divides dim (dim % 128 == 0)."""
    t = min(target, dim)
    while dim % t:
        t -= _LANE
    return t


# ----------------------------------------------------------------------------- #
# Fully fused forward: one pallas_call, everything resident in VMEM.
# ----------------------------------------------------------------------------- #
def _gcn_fused_kernel(a_ref, x_ref, w1_ref, b1_ref, w2_ref, b2_ref,
                      w3_ref, b3_ref, wc_ref, bc_ref,
                      out_ref, h_ref, *, n_valid: int):
    a = a_ref[...]
    # Mask padded node rows to exactly zero after every layer so padding can never
    # leak into valid outputs (robust against future residual/normalization edits).
    row_valid = (jax.lax.broadcasted_iota(jnp.int32, (a.shape[0], 1), 0)
                 < n_valid).astype(jnp.float32)

    def gcn_layer(h_in, w_r, b_r):
        # Feature transform first (F_out <= F_in -> cheaper intermediate), then
        # A_hat aggregation; bias + tanh fused (EUP/VPU filler, no HBM traffic).
        xw = jnp.dot(h_in, w_r[...], preferred_element_type=jnp.float32)
        agg = jnp.dot(a, xw, preferred_element_type=jnp.float32)
        return jnp.tanh(agg + b_r[...]) * row_valid

    h1 = gcn_layer(x_ref[...], w1_ref, b1_ref)
    h2 = gcn_layer(h1, w2_ref, b2_ref)
    h3 = gcn_layer(h2, w3_ref, b3_ref)
    out = (jnp.dot(h3, wc_ref[...], preferred_element_type=jnp.float32)
           + bc_ref[...]) * row_valid

    out_ref[...] = out.astype(out_ref.dtype)
    h_ref[...] = h3.astype(h_ref.dtype)


def _gcn_forward_fused(ap, xp, w1p, b1p, w2p, b2p, w3p, b3p, wcp, bcp, n_valid):
    np_ = ap.shape[0]
    ep = w3p.shape[1]
    cp = wcp.shape[1]
    vmem = pl.BlockSpec(memory_space=pltpu.MemorySpace.VMEM)
    return pl.pallas_call(
        functools.partial(_gcn_fused_kernel, n_valid=n_valid),
        out_shape=(jax.ShapeDtypeStruct((np_, cp), jnp.float32),
                   jax.ShapeDtypeStruct((np_, ep), jnp.float32)),
        in_specs=[vmem] * 10,
        out_specs=(vmem, vmem),
    )(ap, xp, w1p, b1p, w2p, b2p, w3p, b3p, wcp, bcp)


# ----------------------------------------------------------------------------- #
# Fallback for large graphs: generic tiled matmul, out = act(x @ w [+ b]).
# ----------------------------------------------------------------------------- #
def _mm_kernel(x_ref, w_ref, *rest, apply_tanh: bool, apply_bias: bool):
    if apply_bias:
        b_ref, o_ref, acc_ref = rest
    else:
        (o_ref, acc_ref), b_ref = rest, None
    k = pl.program_id(2)

    @pl.when(k == 0)
    def _init():
        acc_ref[...] = jnp.zeros_like(acc_ref)

    acc_ref[...] += jnp.dot(x_ref[...], w_ref[...],
                            preferred_element_type=jnp.float32)

    @pl.when(k == pl.num_programs(2) - 1)
    def _epilogue():
        out = acc_ref[...]
        if apply_bias:
            out = out + b_ref[...]          # f32 bias add (VPU)
        if apply_tanh:
            out = jnp.tanh(out)             # f32 tanh (EUP; f32-safe on v5e too)
        o_ref[...] = out.astype(o_ref.dtype)


def matmul_bias_act(x, w, b=None, *, apply_tanh: bool, out_dtype,
                    tm: int = 1024, tn: int = 512, tk: int = 512):
    """out = act(x @ w [+ b]).  x:(M,K), w:(K,N), b:(1,N); dims multiples of 128."""
    m, k = x.shape
    k2, n = w.shape
    assert k == k2
    apply_bias = b is not None
    tm, tn, tk = _pick_tile(m, tm), _pick_tile(n, tn), _pick_tile(k, tk)
    grid = (m // tm, n // tn, k // tk)

    in_specs = [
        pl.BlockSpec((tm, tk), lambda i, j, kk: (i, kk)),
        pl.BlockSpec((tk, tn), lambda i, j, kk: (kk, j)),
    ]
    operands = [x, w]
    if apply_bias:
        assert b.shape == (1, n)
        in_specs.append(pl.BlockSpec((1, tn), lambda i, j, kk: (0, j)))
        operands.append(b)

    # Advisory only (padded shapes overstate real work at tiny sizes).
    cost = pl.CostEstimate(
        flops=2 * m * n * k,
        transcendentals=(m * n) if apply_tanh else 0,
        bytes_accessed=sum(o.size * o.dtype.itemsize for o in operands)
        + m * n * jnp.dtype(out_dtype).itemsize,
    )

    return pl.pallas_call(
        functools.partial(_mm_kernel, apply_tanh=apply_tanh, apply_bias=apply_bias),
        out_shape=jax.ShapeDtypeStruct((m, n), out_dtype),
        grid_spec=pltpu.PrefetchScalarGridSpec(
            num_scalar_prefetch=0,
            grid=grid,
            in_specs=in_specs,
            out_specs=pl.BlockSpec((tm, tn), lambda i, j, kk: (i, j)),
            scratch_shapes=[pltpu.VMEM((tm, tn), jnp.float32)],
        ),
        compiler_params=pltpu.CompilerParams(
            dimension_semantics=("parallel", "parallel", "arbitrary"),
            # ~7 MiB of tiles at default sizes: safe within the 32 MiB scoped
            # default on v5e/v6e and v7x (64 MiB physical).
            vmem_limit_bytes=32 * 1024 * 1024,
        ),
        cost_estimate=cost,
    )(*operands)


def _gcn_forward_tiled(ap, xp, w1p, b1p, w2p, b2p, w3p, b3p, wcp, bcp):
    bf = jnp.bfloat16
    ap, xp = ap.astype(bf), xp.astype(bf)
    w1p, w2p, w3p, wcp = (w.astype(bf) for w in (w1p, w2p, w3p, wcp))
    # NOTE: padded rows of h1/h2/h3 hold tanh(bias); this never leaks into valid
    # rows because A_hat's padded COLUMNS are zero and the wrapper slices [:n].
    xw1 = matmul_bias_act(xp, w1p, apply_tanh=False, out_dtype=bf)
    h1 = matmul_bias_act(ap, xw1, b1p, apply_tanh=True, out_dtype=bf)
    xw2 = matmul_bias_act(h1, w2p, apply_tanh=False, out_dtype=bf)
    h2 = matmul_bias_act(ap, xw2, b2p, apply_tanh=True, out_dtype=bf)
    xw3 = matmul_bias_act(h2, w3p, apply_tanh=False, out_dtype=bf)
    h3 = matmul_bias_act(ap, xw3, b3p, apply_tanh=True, out_dtype=bf)
    out = matmul_bias_act(h3, wcp, bcp, apply_tanh=False, out_dtype=jnp.float32)
    return out, h3


# ----------------------------------------------------------------------------- #
# GCN forward (matches the PyTorch module's forward semantics: returns (out, h)).
# ----------------------------------------------------------------------------- #
def normalized_adjacency(edge_index, num_nodes: int):
    """Dense A_hat = D^-1/2 (A + I) D^-1/2 from a (2, E) edge_index (undirected)."""
    src, dst = edge_index
    a = jnp.zeros((num_nodes, num_nodes), jnp.float32)
    a = a.at[src, dst].set(1.0)
    a = jnp.maximum(a, a.T)                              # symmetrize
    a = a + jnp.eye(num_nodes, dtype=jnp.float32)        # self-loops
    deg = jnp.sum(a, axis=1)
    inv_sqrt = jnp.where(deg > 0.0, 1.0 / jnp.sqrt(jnp.maximum(deg, 1e-12)), 0.0)
    return a * inv_sqrt[:, None] * inv_sqrt[None, :]


def gcn_forward(x, a_hat, params):
    w1, b1, w2, b2, w3, b3, wc, bc = params
    n, f_in = x.shape
    n_classes, embed = wc.shape[1], w3.shape[1]

    np_ = _round_up(n, _LANE)
    fp = _round_up(f_in, _LANE)
    h1p = _round_up(w1.shape[1], _LANE)
    h2p = _round_up(w2.shape[1], _LANE)
    h3p = _round_up(w3.shape[1], _LANE)
    cp = _round_up(wc.shape[1], _LANE)

    xp = _pad2d(x, np_, fp)
    ap = _pad2d(a_hat, np_, np_)
    w1p = _pad2d(w1, fp, h1p)
    w2p = _pad2d(w2, h1p, h2p)
    w3p = _pad2d(w3, h2p, h3p)
    wcp = _pad2d(wc, h3p, cp)
    b1p = _pad2d(b1[None, :], 1, h1p)
    b2p = _pad2d(b2[None, :], 1, h2p)
    b3p = _pad2d(b3[None, :], 1, h3p)
    bcp = _pad2d(bc[None, :], 1, cp)

    # Resident f32 footprint (A_hat + X + weights + activations) for the fully
    # fused single-call path; if it fits comfortably in VMEM, fuse everything.
    resident_bytes = 4 * (np_ * np_ + np_ * (fp + h1p + h2p + h3p + cp)
                          + fp * h1p + h1p * h2p + h2p * h3p + h3p * cp)
    if resident_bytes <= 16 * 1024 * 1024:
        out, h = _gcn_forward_fused(ap, xp, w1p, b1p, w2p, b2p, w3p, b3p,
                                    wcp, bcp, n)
    else:
        out, h = _gcn_forward_tiled(ap, xp, w1p, b1p, w2p, b2p, w3p, b3p,
                                    wcp, bcp)

    return out[:n, :n_classes].astype(jnp.float32), h[:n, :embed].astype(jnp.float32)


def gcn_reference(x, a_hat, params):
    w1, b1, w2, b2, w3, b3, wc, bc = params
    h = jnp.tanh(a_hat @ (x @ w1) + b1)
    h = jnp.tanh(a_hat @ (h @ w2) + b2)
    h = jnp.tanh(a_hat @ (h @ w3) + b3)
    return h @ wc + bc, h


def _glorot(key, fan_in, fan_out):
    scale = jnp.sqrt(2.0 / (fan_in + fan_out))
    return scale * jax.random.normal(key, (fan_in, fan_out), jnp.float32)


if __name__ == "__main__":
    # KarateClub-like sizes: 34 nodes, one-hot 34-dim features, 4 classes.
    N_NODES, N_FEATURES, HIDDEN, EMBED, N_CLASSES = 34, 34, 4, 2, 4

    key = jax.random.PRNGKey(0)
    k_edges, k_params = jax.random.split(key)

    # Deterministic random undirected graph (stand-in for KarateClub's edge_index).
    upper = jnp.triu(jax.random.bernoulli(k_edges, 0.15, (N_NODES, N_NODES)), k=1)
    src, dst = jnp.nonzero(upper)
    edge_index = jnp.stack([src, dst]).astype(jnp.int32)

    x = jnp.eye(N_NODES, N_FEATURES, dtype=jnp.float32)   # one-hot node features
    a_hat = normalized_adjacency(edge_index, N_NODES)

    kw = jax.random.split(k_params, 8)
    params = (
        _glorot(kw[0], N_FEATURES, HIDDEN), 0.1 * jax.random.normal(kw[1], (HIDDEN,), jnp.float32),
        _glorot(kw[2], HIDDEN, HIDDEN),     0.1 * jax.random.normal(kw[3], (HIDDEN,), jnp.float32),
        _glorot(kw[4], HIDDEN, EMBED),      0.1 * jax.random.normal(kw[5], (EMBED,), jnp.float32),
        _glorot(kw[6], EMBED, N_CLASSES),   0.1 * jax.random.normal(kw[7], (N_CLASSES,), jnp.float32),
    )

    fwd = jax.jit(gcn_forward)
    out, h = jax.block_until_ready(fwd(x, a_hat, params))

    ref_out, ref_h = gcn_reference(x, a_hat, params)
    assert out.shape == (N_NODES, N_CLASSES) and h.shape == (N_NODES, EMBED)
    assert bool(jnp.all(jnp.isfinite(out))) and bool(jnp.all(jnp.isfinite(h)))
    err_out = float(jnp.max(jnp.abs(out - ref_out)))
    err_h = float(jnp.max(jnp.abs(h - ref_h)))
    assert err_out < 5e-2 and err_h < 5e-2, (err_out, err_h)
    print("KERNEL_OK")
</pallas_src>

<mosaic_0001>
module attributes {stable_mosaic.version = 11 : i64} {
  func.func @_gcn_fused_kernel(%arg0: memref<128x128xf32, #tpu.memory_space<vmem>>, %arg1: memref<128x128xf32, #tpu.memory_space<vmem>>, %arg2: memref<128x128xf32, #tpu.memory_space<vmem>>, %arg3: memref<1x128xf32, #tpu.memory_space<vmem>>, %arg4: memref<128x128xf32, #tpu.memory_space<vmem>>, %arg5: memref<1x128xf32, #tpu.memory_space<vmem>>, %arg6: memref<128x128xf32, #tpu.memory_space<vmem>>, %arg7: memref<1x128xf32, #tpu.memory_space<vmem>>, %arg8: memref<128x128xf32, #tpu.memory_space<vmem>>, %arg9: memref<1x128xf32, #tpu.memory_space<vmem>>, %arg10: memref<128x128xf32, #tpu.memory_space<vmem>>, %arg11: memref<128x128xf32, #tpu.memory_space<vmem>>) attributes {dimension_semantics = [], scalar_prefetch = 0 : i64, scratch_operands = 0 : i64, tpu.core_type = #tpu.core_type<tc>} {
    %c0 = arith.constant 0 : index
    %c0_0 = arith.constant 0 : index
    %0 = vector.load %arg0[%c0, %c0_0] : memref<128x128xf32, #tpu.memory_space<vmem>>, vector<128x128xf32>
    %1 = tpu.iota {dimensions = array<i32: 0>} : vector<128x1xi32>
    %c34_i32 = arith.constant 34 : i32
    %2 = vector.broadcast %c34_i32 : i32 to vector<128x1xi32>
    %3 = arith.cmpi slt, %1, %2 : vector<128x1xi32>
    %4 = arith.extui %3 : vector<128x1xi1> to vector<128x1xi32>
    %5 = arith.sitofp %4 : vector<128x1xi32> to vector<128x1xf32>
    %c0_1 = arith.constant 0 : index
    %c0_2 = arith.constant 0 : index
    %6 = vector.load %arg1[%c0_1, %c0_2] : memref<128x128xf32, #tpu.memory_space<vmem>>, vector<128x128xf32>
    %c0_3 = arith.constant 0 : index
    %c0_4 = arith.constant 0 : index
    %7 = vector.load %arg2[%c0_3, %c0_4] : memref<128x128xf32, #tpu.memory_space<vmem>>, vector<128x128xf32>
    %cst = arith.constant dense<0.000000e+00> : vector<128x128xf32>
    %8 = tpu.matmul %6, %7, %cst {dimension_numbers = #tpu.dot_dimension_numbers<[1], [0], [0], [1], [0, 0, 1, 1], [], []>} : vector<128x128xf32>, vector<128x128xf32>, vector<128x128xf32> -> vector<128x128xf32>
    %cst_5 = arith.constant dense<0.000000e+00> : vector<128x128xf32>
    %9 = tpu.matmul %0, %8, %cst_5 {dimension_numbers = #tpu.dot_dimension_numbers<[1], [0], [0], [1], [0, 0, 1, 1], [], []>} : vector<128x128xf32>, vector<128x128xf32>, vector<128x128xf32> -> vector<128x128xf32>
    %c0_6 = arith.constant 0 : index
    %c0_7 = arith.constant 0 : index
    %10 = vector.load %arg3[%c0_6, %c0_7] : memref<1x128xf32, #tpu.memory_space<vmem>>, vector<1x128xf32>
    %11 = vector.broadcast %10 : vector<1x128xf32> to vector<128x128xf32>
    %12 = arith.addf %9, %11 : vector<128x128xf32>
    %13 = math.tanh %12 : vector<128x128xf32>
    %14 = vector.broadcast %5 : vector<128x1xf32> to vector<128x128xf32>
    %15 = arith.mulf %13, %14 : vector<128x128xf32>
    %c0_8 = arith.constant 0 : index
    %c0_9 = arith.constant 0 : index
    %16 = vector.load %arg4[%c0_8, %c0_9] : memref<128x128xf32, #tpu.memory_space<vmem>>, vector<128x128xf32>
    %cst_10 = arith.constant dense<0.000000e+00> : vector<128x128xf32>
    %17 = tpu.matmul %15, %16, %cst_10 {dimension_numbers = #tpu.dot_dimension_numbers<[1], [0], [0], [1], [0, 0, 1, 1], [], []>} : vector<128x128xf32>, vector<128x128xf32>, vector<128x128xf32> -> vector<128x128xf32>
    %cst_11 = arith.constant dense<0.000000e+00> : vector<128x128xf32>
    %18 = tpu.matmul %0, %17, %cst_11 {dimension_numbers = #tpu.dot_dimension_numbers<[1], [0], [0], [1], [0, 0, 1, 1], [], []>} : vector<128x128xf32>, vector<128x128xf32>, vector<128x128xf32> -> vector<128x128xf32>
    %c0_12 = arith.constant 0 : index
    %c0_13 = arith.constant 0 : index
    %19 = vector.load %arg5[%c0_12, %c0_13] : memref<1x128xf32, #tpu.memory_space<vmem>>, vector<1x128xf32>
    %20 = vector.broadcast %19 : vector<1x128xf32> to vector<128x128xf32>
    %21 = arith.addf %18, %20 : vector<128x128xf32>
    %22 = math.tanh %21 : vector<128x128xf32>
    %23 = vector.broadcast %5 : vector<128x1xf32> to vector<128x128xf32>
    %24 = arith.mulf %22, %23 : vector<128x128xf32>
    %c0_14 = arith.constant 0 : index
    %c0_15 = arith.constant 0 : index
    %25 = vector.load %arg6[%c0_14, %c0_15] : memref<128x128xf32, #tpu.memory_space<vmem>>, vector<128x128xf32>
    %cst_16 = arith.constant dense<0.000000e+00> : vector<128x128xf32>
    %26 = tpu.matmul %24, %25, %cst_16 {dimension_numbers = #tpu.dot_dimension_numbers<[1], [0], [0], [1], [0, 0, 1, 1], [], []>} : vector<128x128xf32>, vector<128x128xf32>, vector<128x128xf32> -> vector<128x128xf32>
    %cst_17 = arith.constant dense<0.000000e+00> : vector<128x128xf32>
    %27 = tpu.matmul %0, %26, %cst_17 {dimension_numbers = #tpu.dot_dimension_numbers<[1], [0], [0], [1], [0, 0, 1, 1], [], []>} : vector<128x128xf32>, vector<128x128xf32>, vector<128x128xf32> -> vector<128x128xf32>
    %c0_18 = arith.constant 0 : index
    %c0_19 = arith.constant 0 : index
    %28 = vector.load %arg7[%c0_18, %c0_19] : memref<1x128xf32, #tpu.memory_space<vmem>>, vector<1x128xf32>
    %29 = vector.broadcast %28 : vector<1x128xf32> to vector<128x128xf32>
    %30 = arith.addf %27, %29 : vector<128x128xf32>
    %31 = math.tanh %30 : vector<128x128xf32>
    %32 = vector.broadcast %5 : vector<128x1xf32> to vector<128x128xf32>
    %33 = arith.mulf %31, %32 : vector<128x128xf32>
    %c0_20 = arith.constant 0 : index
    %c0_21 = arith.constant 0 : index
    %34 = vector.load %arg8[%c0_20, %c0_21] : memref<128x128xf32, #tpu.memory_space<vmem>>, vector<128x128xf32>
    %cst_22 = arith.constant dense<0.000000e+00> : vector<128x128xf32>
    %35 = tpu.matmul %33, %34, %cst_22 {dimension_numbers = #tpu.dot_dimension_numbers<[1], [0], [0], [1], [0, 0, 1, 1], [], []>} : vector<128x128xf32>, vector<128x128xf32>, vector<128x128xf32> -> vector<128x128xf32>
    %c0_23 = arith.constant 0 : index
    %c0_24 = arith.constant 0 : index
    %36 = vector.load %arg9[%c0_23, %c0_24] : memref<1x128xf32, #tpu.memory_space<vmem>>, vector<1x128xf32>
    %37 = vector.broadcast %36 : vector<1x128xf32> to vector<128x128xf32>
    %38 = arith.addf %35, %37 : vector<128x128xf32>
    %39 = vector.broadcast %5 : vector<128x1xf32> to vector<128x128xf32>
    %40 = arith.mulf %38, %39 : vector<128x128xf32>
    %c0_25 = arith.constant 0 : index
    %c0_26 = arith.constant 0 : index
    %41 = vector.load %arg10[%c0_25, %c0_26] : memref<128x128xf32, #tpu.memory_space<vmem>>, vector<128x128xf32>
    tpu.vector_store %arg10[%c0_25, %c0_26], %40 {strides = array<i32>} : memref<128x128xf32, #tpu.memory_space<vmem>>, vector<128x128xf32>,
    %c0_27 = arith.constant 0 : index
    %c0_28 = arith.constant 0 : index
    %42 = vector.load %arg11[%c0_27, %c0_28] : memref<128x128xf32, #tpu.memory_space<vmem>>, vector<128x128xf32>
    tpu.vector_store %arg11[%c0_27, %c0_28], %33 {strides = array<i32>} : memref<128x128xf32, #tpu.memory_space<vmem>>, vector<128x128xf32>,
    return
  }
}

</mosaic_0001>

<llo_original>
// kernel: gcn_forward.1
$region0: #{gcn_forward.1}
  #allocation0 [shape = 'u32[]', space=smem, size = 0x4, offset = 0x4, fixed_abs, tag = 'smem constant byte address 0x4 - core index']
  #allocation1 [shape = 'u32[72,128]{1,0:T(1,128)}', space=vmem, size = 0x9000, scoped, tag = 'internal scratch']
  %s0 = inlined_call_operand.vmem [shape: f32[128,128], index: 0, kind: input, shape index: {}]
  %s1 = inlined_call_operand.vmem [shape: f32[128,128], index: 1, kind: input, shape index: {}]
  %s2 = inlined_call_operand.vmem [shape: f32[128,128], index: 2, kind: input, shape index: {}]
  %s3 = inlined_call_operand.vmem [shape: f32[1,128], index: 3, kind: input, shape index: {}]
  %s4 = inlined_call_operand.vmem [shape: f32[128,128], index: 4, kind: input, shape index: {}]
  %s5 = inlined_call_operand.vmem [shape: f32[1,128], index: 5, kind: input, shape index: {}]
  %s6 = inlined_call_operand.vmem [shape: f32[128,128], index: 6, kind: input, shape index: {}]
  %s7 = inlined_call_operand.vmem [shape: f32[1,128], index: 7, kind: input, shape index: {}]
  %s8 = inlined_call_operand.vmem [shape: f32[128,128], index: 8, kind: input, shape index: {}]
  %s9 = inlined_call_operand.vmem [shape: f32[1,128], index: 9, kind: input, shape index: {}]
  %s10 = inlined_call_operand.vmem [shape: f32[128,128], index: 10, kind: output, shape index: {0}]
  %s11 = inlined_call_operand.vmem [shape: f32[128,128], index: 11, kind: output, shape index: {1}]
  %12 = xla_tuple %s10, %s11
  %s13 = sld [smem:[#allocation0]]
  $region58: #{gcn_forward.1} parent=0
    _
  %s15 = ssub.s32 1, %s13
  %s16 = scalar_select 0, %s15, %s13
  // Predicated region
  $region2: #{gcn_forward.1} parent=0 // pred_check
    _
  $region3: #{gcn_forward.1} parent=0 // pred_check_branch
    %18 = sbr.rel (0) target = $region5
  $region4: #{gcn_forward.1} parent=0 // pred_region
    _
  $region5: #{gcn_forward.1} parent=0 // pred_fallthru
    _
  // Predicated region
  $region6: #{gcn_forward.1} parent=0 // pred_check
    _
  $region7: #{gcn_forward.1} parent=0 // pred_check_branch
    %20 = sbr.rel (0) target = $region9
  $region8: #{gcn_forward.1} parent=0 // pred_region
    _
  $region9: #{gcn_forward.1} parent=0 // pred_fallthru
    _
  // Predicated region
  $region10: #{gcn_forward.1} parent=0 // pred_check
    _
  $region11: #{gcn_forward.1} parent=0 // pred_check_branch
    %22 = sbr.rel (0) target = $region13
  $region12: #{gcn_forward.1} parent=0 // pred_region
    _
  $region13: #{gcn_forward.1} parent=0 // pred_fallthru
    _
  // Predicated region
  $region14: #{gcn_forward.1} parent=0 // pred_check
    _
  $region15: #{gcn_forward.1} parent=0 // pred_check_branch
    %24 = sbr.rel (0) target = $region17
  $region16: #{gcn_forward.1} parent=0 // pred_region
    _
  $region17: #{gcn_forward.1} parent=0 // pred_fallthru
    _
  // Predicated region
  $region18: #{gcn_forward.1} parent=0 // pred_check
    _
  $region19: #{gcn_forward.1} parent=0 // pred_check_branch
    %26 = sbr.rel (0) target = $region21
  $region20: #{gcn_forward.1} parent=0 // pred_region
    _
  $region21: #{gcn_forward.1} parent=0 // pred_fallthru
    _
  // Predicated region
  $region22: #{gcn_forward.1} parent=0 // pred_check
    _
  $region23: #{gcn_forward.1} parent=0 // pred_check_branch
    %28 = sbr.rel (0) target = $region25
  $region24: #{gcn_forward.1} parent=0 // pred_region
    _
  $region25: #{gcn_forward.1} parent=0 // pred_fallthru
    _
  // Predicated region
  $region26: #{gcn_forward.1} parent=0 // pred_check
    _
  $region27: #{gcn_forward.1} parent=0 // pred_check_branch
    %30 = sbr.rel (0) target = $region29
  $region28: #{gcn_forward.1} parent=0 // pred_region
    _
  $region29: #{gcn_forward.1} parent=0 // pred_fallthru
    _
  // Predicated region
  $region30: #{gcn_forward.1} parent=0 // pred_check
    _
  $region31: #{gcn_forward.1} parent=0 // pred_check_branch
    %32 = sbr.rel (0) target = $region33
  $region32: #{gcn_forward.1} parent=0 // pred_region
    _
  $region33: #{gcn_forward.1} parent=0 // pred_fallthru
    _
  // Predicated region
  $region34: #{gcn_forward.1} parent=0 // pred_check
    _
  $region35: #{gcn_forward.1} parent=0 // pred_check_branch
    %34 = sbr.rel (0) target = $region37
  $region36: #{gcn_forward.1} parent=0 // pred_region
    _
  $region37: #{gcn_forward.1} parent=0 // pred_fallthru
    _
  // Predicated region
  $region38: #{gcn_forward.1} parent=0 // pred_check
    _
  $region39: #{gcn_forward.1} parent=0 // pred_check_branch
    %36 = sbr.rel (0) target = $region41
  $region40: #{gcn_forward.1} parent=0 // pred_region
    _
  $region41: #{gcn_forward.1} parent=0 // pred_fallthru
    _
  %v37 = vld [vmem:[%s0] sm:$0xff]
  %v38 = vld [vmem:[%s0 + $0x8] sm:$0xff]
  %v39 = vld [vmem:[%s0 + $0x10] sm:$0xff]
  %v40 = vld [vmem:[%s0 + $0x18] sm:$0xff]
  %v41 = vld [vmem:[%s0 + $0x20] sm:$0xff]
  %v42 = vld [vmem:[%s0 + $0x28] sm:$0xff]
  %v43 = vld [vmem:[%s0 + $0x30] sm:$0xff]
  %v44 = vld [vmem:[%s0 + $0x38] sm:$0xff]
  %v45 = vld [vmem:[%s0 + $0x40] sm:$0xff]
  %v46 = vld [vmem:[%s0 + $0x48] sm:$0xff]
  %v47 = vld [vmem:[%s0 + $0x50] sm:$0xff]
  %v48 = vld [vmem:[%s0 + $0x58] sm:$0xff]
  %v49 = vld [vmem:[%s0 + $0x60] sm:$0xff]
  %v50 = vld [vmem:[%s0 + $0x68] sm:$0xff]
  %v51 = vld [vmem:[%s0 + $0x70] sm:$0xff]
  %v52 = vld [vmem:[%s0 + $0x78] sm:$0xff]
  %v53 = vlaneseq
  %v54 = vshrl.u32 %v53, 7
  %v55 = vadd.s32 %v54, 8
  %v56 = vadd.s32 %v54, 16
  %v57 = vadd.s32 %v54, 24
  %v58 = vadd.s32 %v54, 32
  %v59 = vadd.s32 %v54, 40
  %v60 = vadd.s32 %v54, 48
  %v61 = vadd.s32 %v54, 56
  %v62 = vadd.s32 %v54, 64
  %v63 = vadd.s32 %v54, 72
  %v64 = vadd.s32 %v54, 80
  %v65 = vadd.s32 %v54, 88
  %v66 = vadd.s32 %v54, 96
  %v67 = vadd.s32 %v54, 104
  %v68 = vadd.s32 %v54, 112
  %v69 = vadd.s32 %v54, 120
  %vm70 = vcmp.lt.s32.totalorder %v54, 34
  %vm71 = vcmp.lt.s32.totalorder %v55, 34
  %vm72 = vcmp.lt.s32.totalorder %v56, 34
  %vm73 = vcmp.lt.s32.totalorder %v57, 34
  %vm74 = vcmp.lt.s32.totalorder %v58, 34
  %vm75 = vcmp.lt.s32.totalorder %v59, 34
  %vm76 = vcmp.lt.s32.totalorder %v60, 34
  %vm77 = vcmp.lt.s32.totalorder %v61, 34
  %vm78 = vcmp.lt.s32.totalorder %v62, 34
  %vm79 = vcmp.lt.s32.totalorder %v63, 34
  %vm80 = vcmp.lt.s32.totalorder %v64, 34
  %vm81 = vcmp.lt.s32.totalorder %v65, 34
  %vm82 = vcmp.lt.s32.totalorder %v66, 34
  %vm83 = vcmp.lt.s32.totalorder %v67, 34
  %vm84 = vcmp.lt.s32.totalorder %v68, 34
  %vm85 = vcmp.lt.s32.totalorder %v69, 34
  %v86 = vsel %vm70, 1, 0
  %v87 = vsel %vm71, 1, 0
  %v88 = vsel %vm72, 1, 0
  %v89 = vsel %vm73, 1, 0
  %v90 = vsel %vm74, 1, 0
  %v91 = vsel %vm75, 1, 0
  %v92 = vsel %vm76, 1, 0
  %v93 = vsel %vm77, 1, 0
  %v94 = vsel %vm78, 1, 0
  %v95 = vsel %vm79, 1, 0
  %v96 = vsel %vm80, 1, 0
  %v97 = vsel %vm81, 1, 0
  %v98 = vsel %vm82, 1, 0
  %v99 = vsel %vm83, 1, 0
  %v100 = vsel %vm84, 1, 0
  %v101 = vsel %vm85, 1, 0
  %v102 = vcvt.s32.f32 %v86
  %v103 = vcvt.s32.f32 %v87
  %v104 = vcvt.s32.f32 %v88
  %v105 = vcvt.s32.f32 %v89
  %v106 = vcvt.s32.f32 %v90
  %v107 = vcvt.s32.f32 %v91
  %v108 = vcvt.s32.f32 %v92
  %v109 = vcvt.s32.f32 %v93
  %v110 = vcvt.s32.f32 %v94
  %v111 = vcvt.s32.f32 %v95
  %v112 = vcvt.s32.f32 %v96
  %v113 = vcvt.s32.f32 %v97
  %v114 = vcvt.s32.f32 %v98
  %v115 = vcvt.s32.f32 %v99
  %v116 = vcvt.s32.f32 %v100
  %v117 = vcvt.s32.f32 %v101
  %v118 = vld [vmem:[%s1] sm:$0xff]
  %v119 = vld [vmem:[%s1 + $0x8] sm:$0xff]
  %v120 = vld [vmem:[%s1 + $0x10] sm:$0xff]
  %v121 = vld [vmem:[%s1 + $0x18] sm:$0xff]
  %v122 = vld [vmem:[%s1 + $0x20] sm:$0xff]
  %v123 = vld [vmem:[%s1 + $0x28] sm:$0xff]
  %v124 = vld [vmem:[%s1 + $0x30] sm:$0xff]
  %v125 = vld [vmem:[%s1 + $0x38] sm:$0xff]
  %v126 = vld [vmem:[%s1 + $0x40] sm:$0xff]
  %v127 = vld [vmem:[%s1 + $0x48] sm:$0xff]
  %v128 = vld [vmem:[%s1 + $0x50] sm:$0xff]
  %v129 = vld [vmem:[%s1 + $0x58] sm:$0xff]
  %v130 = vld [vmem:[%s1 + $0x60] sm:$0xff]
  %v131 = vld [vmem:[%s1 + $0x68] sm:$0xff]
  %v132 = vld [vmem:[%s1 + $0x70] sm:$0xff]
  %v133 = vld [vmem:[%s1 + $0x78] sm:$0xff]
  %v134 = vld [vmem:[%s2] sm:$0xff]
  %v135 = vld [vmem:[%s2 + $0x8] sm:$0xff]
  %v136 = vld [vmem:[%s2 + $0x10] sm:$0xff]
  %v137 = vld [vmem:[%s2 + $0x18] sm:$0xff]
  %v138 = vld [vmem:[%s2 + $0x20] sm:$0xff]
  %v139 = vld [vmem:[%s2 + $0x28] sm:$0xff]
  %v140 = vld [vmem:[%s2 + $0x30] sm:$0xff]
  %v141 = vld [vmem:[%s2 + $0x38] sm:$0xff]
  %v142 = vld [vmem:[%s2 + $0x40] sm:$0xff]
  %v143 = vld [vmem:[%s2 + $0x48] sm:$0xff]
  %v144 = vld [vmem:[%s2 + $0x50] sm:$0xff]
  %v145 = vld [vmem:[%s2 + $0x58] sm:$0xff]
  %v146 = vld [vmem:[%s2 + $0x60] sm:$0xff]
  %v147 = vld [vmem:[%s2 + $0x68] sm:$0xff]
  %v148 = vld [vmem:[%s2 + $0x70] sm:$0xff]
  %v149 = vld [vmem:[%s2 + $0x78] sm:$0xff]
  %150 = vmatpush.msra.mxu0 %v149
  %151 = vmatpush.msra.mxu0 %v148
  %152 = vmatpush.msra.mxu0 %v147
  %153 = vmatpush.msra.mxu0 %v146
  %154 = vmatpush.msra.mxu0 %v145
  %155 = vmatpush.msra.mxu0 %v144
  %156 = vmatpush.msra.mxu0 %v143
  %157 = vmatpush.msra.mxu0 %v142
  %158 = vmatpush.msra.mxu0 %v141
  %159 = vmatpush.msra.mxu0 %v140
  %160 = vmatpush.msra.mxu0 %v139
  %161 = vmatpush.msra.mxu0 %v138
  %162 = vmatpush.msra.mxu0 %v137
  %163 = vmatpush.msra.mxu0 %v136
  %164 = vmatpush.msra.mxu0 %v135
  %165 = vmatpush.msra.mxu0 %v134
  %166 = vmatmul.f32.gmra.mxu0 %v118
  %v167 = vpop.f32.mrf.mxu0
  %v168 = vadd.f32 0.0, %v167
  %169 = vmatmul.f32.gmra.mxu0 %v119
  %v170 = vpop.f32.mrf.mxu0
  %v171 = vadd.f32 0.0, %v170
  %172 = vmatmul.f32.gmra.mxu0 %v120
  %v173 = vpop.f32.mrf.mxu0
  %v174 = vadd.f32 0.0, %v173
  %175 = vmatmul.f32.gmra.mxu0 %v121
  %v176 = vpop.f32.mrf.mxu0
  %v177 = vadd.f32 0.0, %v176
  %178 = vmatmul.f32.gmra.mxu0 %v122
  %v179 = vpop.f32.mrf.mxu0
  %v180 = vadd.f32 0.0, %v179
  %181 = vmatmul.f32.gmra.mxu0 %v123
  %v182 = vpop.f32.mrf.mxu0
  %v183 = vadd.f32 0.0, %v182
  %184 = vmatmul.f32.gmra.mxu0 %v124
  %v185 = vpop.f32.mrf.mxu0
  %v186 = vadd.f32 0.0, %v185
  %187 = vmatmul.f32.gmra.mxu0 %v125
  %v188 = vpop.f32.mrf.mxu0
  %v189 = vadd.f32 0.0, %v188
  %190 = vmatmul.f32.gmra.mxu0 %v126
  %v191 = vpop.f32.mrf.mxu0
  %v192 = vadd.f32 0.0, %v191
  %193 = vmatmul.f32.gmra.mxu0 %v127
  %v194 = vpop.f32.mrf.mxu0
  %v195 = vadd.f32 0.0, %v194
  %196 = vmatmul.f32.gmra.mxu0 %v128
  %v197 = vpop.f32.mrf.mxu0
  %v198 = vadd.f32 0.0, %v197
  %199 = vmatmul.f32.gmra.mxu0 %v129
  %v200 = vpop.f32.mrf.mxu0
  %v201 = vadd.f32 0.0, %v200
  %202 = vmatmul.f32.gmra.mxu0 %v130
  %v203 = vpop.f32.mrf.mxu0
  %v204 = vadd.f32 0.0, %v203
  %205 = vmatmul.f32.gmra.mxu0 %v131
  %v206 = vpop.f32.mrf.mxu0
  %v207 = vadd.f32 0.0, %v206
  %208 = vmatmul.f32.gmra.mxu0 %v132
  %v209 = vpop.f32.mrf.mxu0
  %v210 = vadd.f32 0.0, %v209
  %211 = vmatmul.f32.gmra.mxu0 %v133
  %v212 = vpop.f32.mrf.mxu0
  %v213 = vadd.f32 0.0, %v212
  %214 = vdwg.mxu0
  %v215 = vld [vmem:[%s3] sm:$0x1]
  %v217 = vperm.slane %v215, 0
  %219 = vmatpush.msra.mxu0 %v213
  %220 = vmatpush.msra.mxu0 %v210
  %221 = vmatpush.msra.mxu0 %v207
  %222 = vmatpush.msra.mxu0 %v204
  %223 = vmatpush.msra.mxu0 %v201
  %224 = vmatpush.msra.mxu0 %v198
  %225 = vmatpush.msra.mxu0 %v195
  %226 = vmatpush.msra.mxu0 %v192
  %227 = vmatpush.msra.mxu0 %v189
  %228 = vmatpush.msra.mxu0 %v186
  %229 = vmatpush.msra.mxu0 %v183
  %230 = vmatpush.msra.mxu0 %v180
  %231 = vmatpush.msra.mxu0 %v177
  %232 = vmatpush.msra.mxu0 %v174
  %233 = vmatpush.msra.mxu0 %v171
  %234 = vmatpush.msra.mxu0 %v168
  %235 = vmatmul.f32.gmra.mxu0 %v37
  %v236 = vpop.f32.mrf.mxu0
  %v237 = vadd.f32 %v217, %v236
  %238 = vmatmul.f32.gmra.mxu0 %v38
  %v239 = vpop.f32.mrf.mxu0
  %v240 = vadd.f32 %v217, %v239
  %241 = vmatmul.f32.gmra.mxu0 %v39
  %v242 = vpop.f32.mrf.mxu0
  %v243 = vadd.f32 %v217, %v242
  %244 = vmatmul.f32.gmra.mxu0 %v40
  %v245 = vpop.f32.mrf.mxu0
  %v246 = vadd.f32 %v217, %v245
  %247 = vmatmul.f32.gmra.mxu0 %v41
  %v248 = vpop.f32.mrf.mxu0
  %v249 = vadd.f32 %v217, %v248
  %250 = vmatmul.f32.gmra.mxu0 %v42
  %v251 = vpop.f32.mrf.mxu0
  %v252 = vadd.f32 %v217, %v251
  %253 = vmatmul.f32.gmra.mxu0 %v43
  %v254 = vpop.f32.mrf.mxu0
  %v255 = vadd.f32 %v217, %v254
  %256 = vmatmul.f32.gmra.mxu0 %v44
  %v257 = vpop.f32.mrf.mxu0
  %v258 = vadd.f32 %v217, %v257
  %259 = vmatmul.f32.gmra.mxu0 %v45
  %v260 = vpop.f32.mrf.mxu0
  %v261 = vadd.f32 %v217, %v260
  %262 = vmatmul.f32.gmra.mxu0 %v46
  %v263 = vpop.f32.mrf.mxu0
  %v264 = vadd.f32 %v217, %v263
  %265 = vmatmul.f32.gmra.mxu0 %v47
  %v266 = vpop.f32.mrf.mxu0
  %v267 = vadd.f32 %v217, %v266
  %268 = vmatmul.f32.gmra.mxu0 %v48
  %v269 = vpop.f32.mrf.mxu0
  %v270 = vadd.f32 %v217, %v269
  %271 = vmatmul.f32.gmra.mxu0 %v49
  %v272 = vpop.f32.mrf.mxu0
  %v273 = vadd.f32 %v217, %v272
  %274 = vmatmul.f32.gmra.mxu0 %v50
  %v275 = vpop.f32.mrf.mxu0
  %v276 = vadd.f32 %v217, %v275
  %277 = vmatmul.f32.gmra.mxu0 %v51
  %v278 = vpop.f32.mrf.mxu0
  %v279 = vadd.f32 %v217, %v278
  %280 = vmatmul.f32.gmra.mxu0 %v52
  %v281 = vpop.f32.mrf.mxu0
  %v282 = vadd.f32 %v217, %v281
  %283 = vdwg.mxu0
  %v284 = vtanh.pop %v237
  %v285 = vtanh.pop %v240
  %v286 = vtanh.pop %v243
  %v287 = vtanh.pop %v246
  %v288 = vtanh.pop %v249
  %v289 = vtanh.pop %v252
  %v290 = vtanh.pop %v255
  %v291 = vtanh.pop %v258
  %v292 = vtanh.pop %v261
  %v293 = vtanh.pop %v264
  %v294 = vtanh.pop %v267
  %v295 = vtanh.pop %v270
  %v296 = vtanh.pop %v273
  %v297 = vtanh.pop %v276
  %v298 = vtanh.pop %v279
  %v299 = vtanh.pop %v282
  %v300 = vmul.f32 %v284, %v102
  %v301 = vmul.f32 %v285, %v103
  %v302 = vmul.f32 %v286, %v104
  %v303 = vmul.f32 %v287, %v105
  %v304 = vmul.f32 %v288, %v106
  %v305 = vmul.f32 %v289, %v107
  %v306 = vmul.f32 %v290, %v108
  %v307 = vmul.f32 %v291, %v109
  %v308 = vmul.f32 %v292, %v110
  %v309 = vmul.f32 %v293, %v111
  %v310 = vmul.f32 %v294, %v112
  %v311 = vmul.f32 %v295, %v113
  %v312 = vmul.f32 %v296, %v114
  %v313 = vmul.f32 %v297, %v115
  %v314 = vmul.f32 %v298, %v116
  %v315 = vmul.f32 %v299, %v117
  %v316 = vld [vmem:[%s4] sm:$0xff]
  %v317 = vld [vmem:[%s4 + $0x8] sm:$0xff]
  %v318 = vld [vmem:[%s4 + $0x10] sm:$0xff]
  %v319 = vld [vmem:[%s4 + $0x18] sm:$0xff]
  %v320 = vld [vmem:[%s4 + $0x20] sm:$0xff]
  %v321 = vld [vmem:[%s4 + $0x28] sm:$0xff]
  %v322 = vld [vmem:[%s4 + $0x30] sm:$0xff]
  %v323 = vld [vmem:[%s4 + $0x38] sm:$0xff]
  %v324 = vld [vmem:[%s4 + $0x40] sm:$0xff]
  %v325 = vld [vmem:[%s4 + $0x48] sm:$0xff]
  %v326 = vld [vmem:[%s4 + $0x50] sm:$0xff]
  %v327 = vld [vmem:[%s4 + $0x58] sm:$0xff]
  %v328 = vld [vmem:[%s4 + $0x60] sm:$0xff]
  %v329 = vld [vmem:[%s4 + $0x68] sm:$0xff]
  %v330 = vld [vmem:[%s4 + $0x70] sm:$0xff]
  %v331 = vld [vmem:[%s4 + $0x78] sm:$0xff]
  %332 = vmatpush.msra.mxu0 %v331
  %333 = vmatpush.msra.mxu0 %v330
  %334 = vmatpush.msra.mxu0 %v329
  %335 = vmatpush.msra.mxu0 %v328
  %336 = vmatpush.msra.mxu0 %v327
  %337 = vmatpush.msra.mxu0 %v326
  %338 = vmatpush.msra.mxu0 %v325
  %339 = vmatpush.msra.mxu0 %v324
  %340 = vmatpush.msra.mxu0 %v323
  %341 = vmatpush.msra.mxu0 %v322
  %342 = vmatpush.msra.mxu0 %v321
  %343 = vmatpush.msra.mxu0 %v320
  %344 = vmatpush.msra.mxu0 %v319
  %345 = vmatpush.msra.mxu0 %v318
  %346 = vmatpush.msra.mxu0 %v317
  %347 = vmatpush.msra.mxu0 %v316
  %348 = vmatmul.f32.gmra.mxu0 %v300
  %v349 = vpop.f32.mrf.mxu0
  %v350 = vadd.f32 0.0, %v349
  %351 = vmatmul.f32.gmra.mxu0 %v301
  %v352 = vpop.f32.mrf.mxu0
  %v353 = vadd.f32 0.0, %v352
  %354 = vmatmul.f32.gmra.mxu0 %v302
  %v355 = vpop.f32.mrf.mxu0
  %v356 = vadd.f32 0.0, %v355
  %357 = vmatmul.f32.gmra.mxu0 %v303
  %v358 = vpop.f32.mrf.mxu0
  %v359 = vadd.f32 0.0, %v358
  %360 = vmatmul.f32.gmra.mxu0 %v304
  %v361 = vpop.f32.mrf.mxu0
  %v362 = vadd.f32 0.0, %v361
  %363 = vmatmul.f32.gmra.mxu0 %v305
  %v364 = vpop.f32.mrf.mxu0
  %v365 = vadd.f32 0.0, %v364
  %366 = vmatmul.f32.gmra.mxu0 %v306
  %v367 = vpop.f32.mrf.mxu0
  %v368 = vadd.f32 0.0, %v367
  %369 = vmatmul.f32.gmra.mxu0 %v307
  %v370 = vpop.f32.mrf.mxu0
  %v371 = vadd.f32 0.0, %v370
  %372 = vmatmul.f32.gmra.mxu0 %v308
  %v373 = vpop.f32.mrf.mxu0
  %v374 = vadd.f32 0.0, %v373
  %375 = vmatmul.f32.gmra.mxu0 %v309
  %v376 = vpop.f32.mrf.mxu0
  %v377 = vadd.f32 0.0, %v376
  %378 = vmatmul.f32.gmra.mxu0 %v310
  %v379 = vpop.f32.mrf.mxu0
  %v380 = vadd.f32 0.0, %v379
  %381 = vmatmul.f32.gmra.mxu0 %v311
  %v382 = vpop.f32.mrf.mxu0
  %v383 = vadd.f32 0.0, %v382
  %384 = vmatmul.f32.gmra.mxu0 %v312
  %v385 = vpop.f32.mrf.mxu0
  %v386 = vadd.f32 0.0, %v385
  %387 = vmatmul.f32.gmra.mxu0 %v313
  %v388 = vpop.f32.mrf.mxu0
  %v389 = vadd.f32 0.0, %v388
  %390 = vmatmul.f32.gmra.mxu0 %v314
  %v391 = vpop.f32.mrf.mxu0
  %v392 = vadd.f32 0.0, %v391
  %393 = vmatmul.f32.gmra.mxu0 %v315
  %v394 = vpop.f32.mrf.mxu0
  %v395 = vadd.f32 0.0, %v394
  %396 = vdwg.mxu0
  %v397 = vld [vmem:[%s5] sm:$0x1]
  %v399 = vperm.slane %v397, 0
  %401 = vmatpush.msra.mxu0 %v395
  %402 = vmatpush.msra.mxu0 %v392
  %403 = vmatpush.msra.mxu0 %v389
  %404 = vmatpush.msra.mxu0 %v386
  %405 = vmatpush.msra.mxu0 %v383
  %406 = vmatpush.msra.mxu0 %v380
  %407 = vmatpush.msra.mxu0 %v377
  %408 = vmatpush.msra.mxu0 %v374
  %409 = vmatpush.msra.mxu0 %v371
  %410 = vmatpush.msra.mxu0 %v368
  %411 = vmatpush.msra.mxu0 %v365
  %412 = vmatpush.msra.mxu0 %v362
  %413 = vmatpush.msra.mxu0 %v359
  %414 = vmatpush.msra.mxu0 %v356
  %415 = vmatpush.msra.mxu0 %v353
  %416 = vmatpush.msra.mxu0 %v350
  %417 = vmatmul.f32.gmra.mxu0 %v37
  %v418 = vpop.f32.mrf.mxu0
  %v419 = vadd.f32 %v399, %v418
  %420 = vmatmul.f32.gmra.mxu0 %v38
  %v421 = vpop.f32.mrf.mxu0
  %v422 = vadd.f32 %v399, %v421
  %423 = vmatmul.f32.gmra.mxu0 %v39
  %v424 = vpop.f32.mrf.mxu0
  %v425 = vadd.f32 %v399, %v424
  %426 = vmatmul.f32.gmra.mxu0 %v40
  %v427 = vpop.f32.mrf.mxu0
  %v428 = vadd.f32 %v399, %v427
  %429 = vmatmul.f32.gmra.mxu0 %v41
  %v430 = vpop.f32.mrf.mxu0
  %v431 = vadd.f32 %v399, %v430
  %432 = vmatmul.f32.gmra.mxu0 %v42
  %v433 = vpop.f32.mrf.mxu0
  %v434 = vadd.f32 %v399, %v433
  %435 = vmatmul.f32.gmra.mxu0 %v43
  %v436 = vpop.f32.mrf.mxu0
  %v437 = vadd.f32 %v399, %v436
  %438 = vmatmul.f32.gmra.mxu0 %v44
  %v439 = vpop.f32.mrf.mxu0
  %v440 = vadd.f32 %v399, %v439
  %441 = vmatmul.f32.gmra.mxu0 %v45
  %v442 = vpop.f32.mrf.mxu0
  %v443 = vadd.f32 %v399, %v442
  %444 = vmatmul.f32.gmra.mxu0 %v46
  %v445 = vpop.f32.mrf.mxu0
  %v446 = vadd.f32 %v399, %v445
  %447 = vmatmul.f32.gmra.mxu0 %v47
  %v448 = vpop.f32.mrf.mxu0
  %v449 = vadd.f32 %v399, %v448
  %450 = vmatmul.f32.gmra.mxu0 %v48
  %v451 = vpop.f32.mrf.mxu0
  %v452 = vadd.f32 %v399, %v451
  %453 = vmatmul.f32.gmra.mxu0 %v49
  %v454 = vpop.f32.mrf.mxu0
  %v455 = vadd.f32 %v399, %v454
  %456 = vmatmul.f32.gmra.mxu0 %v50
  %v457 = vpop.f32.mrf.mxu0
  %v458 = vadd.f32 %v399, %v457
  %459 = vmatmul.f32.gmra.mxu0 %v51
  %v460 = vpop.f32.mrf.mxu0
  %v461 = vadd.f32 %v399, %v460
  %462 = vmatmul.f32.gmra.mxu0 %v52
  %v463 = vpop.f32.mrf.mxu0
  %v464 = vadd.f32 %v399, %v463
  %465 = vdwg.mxu0
  %v466 = vtanh.pop %v419
  %v467 = vtanh.pop %v422
  %v468 = vtanh.pop %v425
  %v469 = vtanh.pop %v428
  %v470 = vtanh.pop %v431
  %v471 = vtanh.pop %v434
  %v472 = vtanh.pop %v437
  %v473 = vtanh.pop %v440
  %v474 = vtanh.pop %v443
  %v475 = vtanh.pop %v446
  %v476 = vtanh.pop %v449
  %v477 = vtanh.pop %v452
  %v478 = vtanh.pop %v455
  %v479 = vtanh.pop %v458
  %v480 = vtanh.pop %v461
  %v481 = vtanh.pop %v464
  %v482 = vmul.f32 %v466, %v102
  %v483 = vmul.f32 %v467, %v103
  %v484 = vmul.f32 %v468, %v104
  %v485 = vmul.f32 %v469, %v105
  %v486 = vmul.f32 %v470, %v106
  %v487 = vmul.f32 %v471, %v107
  %v488 = vmul.f32 %v472, %v108
  %v489 = vmul.f32 %v473, %v109
  %v490 = vmul.f32 %v474, %v110
  %v491 = vmul.f32 %v475, %v111
  %v492 = vmul.f32 %v476, %v112
  %v493 = vmul.f32 %v477, %v113
  %v494 = vmul.f32 %v478, %v114
  %v495 = vmul.f32 %v479, %v115
  %v496 = vmul.f32 %v480, %v116
  %v497 = vmul.f32 %v481, %v117
  %v498 = vld [vmem:[%s6] sm:$0xff]
  %v499 = vld [vmem:[%s6 + $0x8] sm:$0xff]
  %v500 = vld [vmem:[%s6 + $0x10] sm:$0xff]
  %v501 = vld [vmem:[%s6 + $0x18] sm:$0xff]
  %v502 = vld [vmem:[%s6 + $0x20] sm:$0xff]
  %v503 = vld [vmem:[%s6 + $0x28] sm:$0xff]
  %v504 = vld [vmem:[%s6 + $0x30] sm:$0xff]
  %v505 = vld [vmem:[%s6 + $0x38] sm:$0xff]
  %v506 = vld [vmem:[%s6 + $0x40] sm:$0xff]
  %v507 = vld [vmem:[%s6 + $0x48] sm:$0xff]
  %v508 = vld [vmem:[%s6 + $0x50] sm:$0xff]
  %v509 = vld [vmem:[%s6 + $0x58] sm:$0xff]
  %v510 = vld [vmem:[%s6 + $0x60] sm:$0xff]
  %v511 = vld [vmem:[%s6 + $0x68] sm:$0xff]
  %v512 = vld [vmem:[%s6 + $0x70] sm:$0xff]
  %v513 = vld [vmem:[%s6 + $0x78] sm:$0xff]
  %514 = vmatpush.msra.mxu0 %v513
  %515 = vmatpush.msra.mxu0 %v512
  %516 = vmatpush.msra.mxu0 %v511
  %517 = vmatpush.msra.mxu0 %v510
  %518 = vmatpush.msra.mxu0 %v509
  %519 = vmatpush.msra.mxu0 %v508
  %520 = vmatpush.msra.mxu0 %v507
  %521 = vmatpush.msra.mxu0 %v506
  %522 = vmatpush.msra.mxu0 %v505
  %523 = vmatpush.msra.mxu0 %v504
  %524 = vmatpush.msra.mxu0 %v503
  %525 = vmatpush.msra.mxu0 %v502
  %526 = vmatpush.msra.mxu0 %v501
  %527 = vmatpush.msra.mxu0 %v500
  %528 = vmatpush.msra.mxu0 %v499
  %529 = vmatpush.msra.mxu0 %v498
  %530 = vmatmul.f32.gmra.mxu0 %v482
  %v531 = vpop.f32.mrf.mxu0
  %v532 = vadd.f32 0.0, %v531
  %533 = vmatmul.f32.gmra.mxu0 %v483
  %v534 = vpop.f32.mrf.mxu0
  %v535 = vadd.f32 0.0, %v534
  %536 = vmatmul.f32.gmra.mxu0 %v484
  %v537 = vpop.f32.mrf.mxu0
  %v538 = vadd.f32 0.0, %v537
  %539 = vmatmul.f32.gmra.mxu0 %v485
  %v540 = vpop.f32.mrf.mxu0
  %v541 = vadd.f32 0.0, %v540
  %542 = vmatmul.f32.gmra.mxu0 %v486
  %v543 = vpop.f32.mrf.mxu0
  %v544 = vadd.f32 0.0, %v543
  %545 = vmatmul.f32.gmra.mxu0 %v487
  %v546 = vpop.f32.mrf.mxu0
  %v547 = vadd.f32 0.0, %v546
  %548 = vmatmul.f32.gmra.mxu0 %v488
  %v549 = vpop.f32.mrf.mxu0
  %v550 = vadd.f32 0.0, %v549
  %551 = vmatmul.f32.gmra.mxu0 %v489
  %v552 = vpop.f32.mrf.mxu0
  %v553 = vadd.f32 0.0, %v552
  %554 = vmatmul.f32.gmra.mxu0 %v490
  %v555 = vpop.f32.mrf.mxu0
  %v556 = vadd.f32 0.0, %v555
  %557 = vmatmul.f32.gmra.mxu0 %v491
  %v558 = vpop.f32.mrf.mxu0
  %v559 = vadd.f32 0.0, %v558
  %560 = vmatmul.f32.gmra.mxu0 %v492
  %v561 = vpop.f32.mrf.mxu0
  %v562 = vadd.f32 0.0, %v561
  %563 = vmatmul.f32.gmra.mxu0 %v493
  %v564 = vpop.f32.mrf.mxu0
  %v565 = vadd.f32 0.0, %v564
  %566 = vmatmul.f32.gmra.mxu0 %v494
  %v567 = vpop.f32.mrf.mxu0
  %v568 = vadd.f32 0.0, %v567
  %569 = vmatmul.f32.gmra.mxu0 %v495
  %v570 = vpop.f32.mrf.mxu0
  %v571 = vadd.f32 0.0, %v570
  %572 = vmatmul.f32.gmra.mxu0 %v496
  %v573 = vpop.f32.mrf.mxu0
  %v574 = vadd.f32 0.0, %v573
  %575 = vmatmul.f32.gmra.mxu0 %v497
  %v576 = vpop.f32.mrf.mxu0
  %v577 = vadd.f32 0.0, %v576
  %578 = vdwg.mxu0
  %v579 = vld [vmem:[%s7] sm:$0x1]
  %v581 = vperm.slane %v579, 0
  %583 = vmatpush.msra.mxu0 %v577
  %584 = vmatpush.msra.mxu0 %v574
  %585 = vmatpush.msra.mxu0 %v571
  %586 = vmatpush.msra.mxu0 %v568
  %587 = vmatpush.msra.mxu0 %v565
  %588 = vmatpush.msra.mxu0 %v562
  %589 = vmatpush.msra.mxu0 %v559
  %590 = vmatpush.msra.mxu0 %v556
  %591 = vmatpush.msra.mxu0 %v553
  %592 = vmatpush.msra.mxu0 %v550
  %593 = vmatpush.msra.mxu0 %v547
  %594 = vmatpush.msra.mxu0 %v544
  %595 = vmatpush.msra.mxu0 %v541
  %596 = vmatpush.msra.mxu0 %v538
  %597 = vmatpush.msra.mxu0 %v535
  %598 = vmatpush.msra.mxu0 %v532
  %599 = vmatmul.f32.gmra.mxu0 %v37
  %v600 = vpop.f32.mrf.mxu0
  %v601 = vadd.f32 %v581, %v600
  %602 = vmatmul.f32.gmra.mxu0 %v38
  %v603 = vpop.f32.mrf.mxu0
  %v604 = vadd.f32 %v581, %v603
  %605 = vmatmul.f32.gmra.mxu0 %v39
  %v606 = vpop.f32.mrf.mxu0
  %v607 = vadd.f32 %v581, %v606
  %608 = vmatmul.f32.gmra.mxu0 %v40
  %v609 = vpop.f32.mrf.mxu0
  %v610 = vadd.f32 %v581, %v609
  %611 = vmatmul.f32.gmra.mxu0 %v41
  %v612 = vpop.f32.mrf.mxu0
  %v613 = vadd.f32 %v581, %v612
  %614 = vmatmul.f32.gmra.mxu0 %v42
  %v615 = vpop.f32.mrf.mxu0
  %v616 = vadd.f32 %v581, %v615
  %617 = vmatmul.f32.gmra.mxu0 %v43
  %v618 = vpop.f32.mrf.mxu0
  %v619 = vadd.f32 %v581, %v618
  %620 = vmatmul.f32.gmra.mxu0 %v44
  %v621 = vpop.f32.mrf.mxu0
  %v622 = vadd.f32 %v581, %v621
  %623 = vmatmul.f32.gmra.mxu0 %v45
  %v624 = vpop.f32.mrf.mxu0
  %v625 = vadd.f32 %v581, %v624
  %626 = vmatmul.f32.gmra.mxu0 %v46
  %v627 = vpop.f32.mrf.mxu0
  %v628 = vadd.f32 %v581, %v627
  %629 = vmatmul.f32.gmra.mxu0 %v47
  %v630 = vpop.f32.mrf.mxu0
  %v631 = vadd.f32 %v581, %v630
  %632 = vmatmul.f32.gmra.mxu0 %v48
  %v633 = vpop.f32.mrf.mxu0
  %v634 = vadd.f32 %v581, %v633
  %635 = vmatmul.f32.gmra.mxu0 %v49
  %v636 = vpop.f32.mrf.mxu0
  %v637 = vadd.f32 %v581, %v636
  %638 = vmatmul.f32.gmra.mxu0 %v50
  %v639 = vpop.f32.mrf.mxu0
  %v640 = vadd.f32 %v581, %v639
  %641 = vmatmul.f32.gmra.mxu0 %v51
  %v642 = vpop.f32.mrf.mxu0
  %v643 = vadd.f32 %v581, %v642
  %644 = vmatmul.f32.gmra.mxu0 %v52
  %v645 = vpop.f32.mrf.mxu0
  %v646 = vadd.f32 %v581, %v645
  %647 = vdwg.mxu0
  %v648 = vtanh.pop %v601
  %v649 = vtanh.pop %v604
  %v650 = vtanh.pop %v607
  %v651 = vtanh.pop %v610
  %v652 = vtanh.pop %v613
  %v653 = vtanh.pop %v616
  %v654 = vtanh.pop %v619
  %v655 = vtanh.pop %v622
  %v656 = vtanh.pop %v625
  %v657 = vtanh.pop %v628
  %v658 = vtanh.pop %v631
  %v659 = vtanh.pop %v634
  %v660 = vtanh.pop %v637
  %v661 = vtanh.pop %v640
  %v662 = vtanh.pop %v643
  %v663 = vtanh.pop %v646
  %v664 = vmul.f32 %v648, %v102
  %v665 = vmul.f32 %v649, %v103
  %v666 = vmul.f32 %v650, %v104
  %v667 = vmul.f32 %v651, %v105
  %v668 = vmul.f32 %v652, %v106
  %v669 = vmul.f32 %v653, %v107
  %v670 = vmul.f32 %v654, %v108
  %v671 = vmul.f32 %v655, %v109
  %v672 = vmul.f32 %v656, %v110
  %v673 = vmul.f32 %v657, %v111
  %v674 = vmul.f32 %v658, %v112
  %v675 = vmul.f32 %v659, %v113
  %v676 = vmul.f32 %v660, %v114
  %v677 = vmul.f32 %v661, %v115
  %v678 = vmul.f32 %v662, %v116
  %v679 = vmul.f32 %v663, %v117
  %v680 = vld [vmem:[%s8] sm:$0xff]
  %v681 = vld [vmem:[%s8 + $0x8] sm:$0xff]
  %v682 = vld [vmem:[%s8 + $0x10] sm:$0xff]
  %v683 = vld [vmem:[%s8 + $0x18] sm:$0xff]
  %v684 = vld [vmem:[%s8 + $0x20] sm:$0xff]
  %v685 = vld [vmem:[%s8 + $0x28] sm:$0xff]
  %v686 = vld [vmem:[%s8 + $0x30] sm:$0xff]
  %v687 = vld [vmem:[%s8 + $0x38] sm:$0xff]
  %v688 = vld [vmem:[%s8 + $0x40] sm:$0xff]
  %v689 = vld [vmem:[%s8 + $0x48] sm:$0xff]
  %v690 = vld [vmem:[%s8 + $0x50] sm:$0xff]
  %v691 = vld [vmem:[%s8 + $0x58] sm:$0xff]
  %v692 = vld [vmem:[%s8 + $0x60] sm:$0xff]
  %v693 = vld [vmem:[%s8 + $0x68] sm:$0xff]
  %v694 = vld [vmem:[%s8 + $0x70] sm:$0xff]
  %v695 = vld [vmem:[%s8 + $0x78] sm:$0xff]
  %v696 = vld [vmem:[%s9] sm:$0x1]
  %v698 = vperm.slane %v696, 0
  %700 = vmatpush.msra.mxu0 %v695
  %701 = vmatpush.msra.mxu0 %v694
  %702 = vmatpush.msra.mxu0 %v693
  %703 = vmatpush.msra.mxu0 %v692
  %704 = vmatpush.msra.mxu0 %v691
  %705 = vmatpush.msra.mxu0 %v690
  %706 = vmatpush.msra.mxu0 %v689
  %707 = vmatpush.msra.mxu0 %v688
  %708 = vmatpush.msra.mxu0 %v687
  %709 = vmatpush.msra.mxu0 %v686
  %710 = vmatpush.msra.mxu0 %v685
  %711 = vmatpush.msra.mxu0 %v684
  %712 = vmatpush.msra.mxu0 %v683
  %713 = vmatpush.msra.mxu0 %v682
  %714 = vmatpush.msra.mxu0 %v681
  %715 = vmatpush.msra.mxu0 %v680
  %716 = vmatmul.f32.gmra.mxu0 %v664
  %v717 = vpop.f32.mrf.mxu0
  %v718 = vadd.f32 %v698, %v717
  %719 = vmatmul.f32.gmra.mxu0 %v665
  %v720 = vpop.f32.mrf.mxu0
  %v721 = vadd.f32 %v698, %v720
  %722 = vmatmul.f32.gmra.mxu0 %v666
  %v723 = vpop.f32.mrf.mxu0
  %v724 = vadd.f32 %v698, %v723
  %725 = vmatmul.f32.gmra.mxu0 %v667
  %v726 = vpop.f32.mrf.mxu0
  %v727 = vadd.f32 %v698, %v726
  %728 = vmatmul.f32.gmra.mxu0 %v668
  %v729 = vpop.f32.mrf.mxu0
  %v730 = vadd.f32 %v698, %v729
  %731 = vmatmul.f32.gmra.mxu0 %v669
  %v732 = vpop.f32.mrf.mxu0
  %v733 = vadd.f32 %v698, %v732
  %734 = vmatmul.f32.gmra.mxu0 %v670
  %v735 = vpop.f32.mrf.mxu0
  %v736 = vadd.f32 %v698, %v735
  %737 = vmatmul.f32.gmra.mxu0 %v671
  %v738 = vpop.f32.mrf.mxu0
  %v739 = vadd.f32 %v698, %v738
  %740 = vmatmul.f32.gmra.mxu0 %v672
  %v741 = vpop.f32.mrf.mxu0
  %v742 = vadd.f32 %v698, %v741
  %743 = vmatmul.f32.gmra.mxu0 %v673
  %v744 = vpop.f32.mrf.mxu0
  %v745 = vadd.f32 %v698, %v744
  %746 = vmatmul.f32.gmra.mxu0 %v674
  %v747 = vpop.f32.mrf.mxu0
  %v748 = vadd.f32 %v698, %v747
  %749 = vmatmul.f32.gmra.mxu0 %v675
  %v750 = vpop.f32.mrf.mxu0
  %v751 = vadd.f32 %v698, %v750
  %752 = vmatmul.f32.gmra.mxu0 %v676
  %v753 = vpop.f32.mrf.mxu0
  %v754 = vadd.f32 %v698, %v753
  %755 = vmatmul.f32.gmra.mxu0 %v677
  %v756 = vpop.f32.mrf.mxu0
  %v757 = vadd.f32 %v698, %v756
  %758 = vmatmul.f32.gmra.mxu0 %v678
  %v759 = vpop.f32.mrf.mxu0
  %v760 = vadd.f32 %v698, %v759
  %761 = vmatmul.f32.gmra.mxu0 %v679
  %v762 = vpop.f32.mrf.mxu0
  %v763 = vadd.f32 %v698, %v762
  %764 = vdwg.mxu0
  %v765 = vmul.f32 %v718, %v102
  %v766 = vmul.f32 %v721, %v103
  %v767 = vmul.f32 %v724, %v104
  %v768 = vmul.f32 %v727, %v105
  %v769 = vmul.f32 %v730, %v106
  %v770 = vmul.f32 %v733, %v107
  %v771 = vmul.f32 %v736, %v108
  %v772 = vmul.f32 %v739, %v109
  %v773 = vmul.f32 %v742, %v110
  %v774 = vmul.f32 %v745, %v111
  %v775 = vmul.f32 %v748, %v112
  %v776 = vmul.f32 %v751, %v113
  %v777 = vmul.f32 %v754, %v114
  %v778 = vmul.f32 %v757, %v115
  %v779 = vmul.f32 %v760, %v116
  %v780 = vmul.f32 %v763, %v117
  %781 = vst [vmem:[%s10] sm:$0xff] %v765
  %782 = vst [vmem:[%s10 + $0x8] sm:$0xff] %v766
  %783 = vst [vmem:[%s10 + $0x10] sm:$0xff] %v767
  %784 = vst [vmem:[%s10 + $0x18] sm:$0xff] %v768
  %785 = vst [vmem:[%s10 + $0x20] sm:$0xff] %v769
  %786 = vst [vmem:[%s10 + $0x28] sm:$0xff] %v770
  %787 = vst [vmem:[%s10 + $0x30] sm:$0xff] %v771
  %788 = vst [vmem:[%s10 + $0x38] sm:$0xff] %v772
  %789 = vst [vmem:[%s10 + $0x40] sm:$0xff] %v773
  %790 = vst [vmem:[%s10 + $0x48] sm:$0xff] %v774
  %791 = vst [vmem:[%s10 + $0x50] sm:$0xff] %v775
  %792 = vst [vmem:[%s10 + $0x58] sm:$0xff] %v776
  %793 = vst [vmem:[%s10 + $0x60] sm:$0xff] %v777
  %794 = vst [vmem:[%s10 + $0x68] sm:$0xff] %v778
  %795 = vst [vmem:[%s10 + $0x70] sm:$0xff] %v779
  %796 = vst [vmem:[%s10 + $0x78] sm:$0xff] %v780
  %797 = vst [vmem:[%s11] sm:$0xff] %v664
  %798 = vst [vmem:[%s11 + $0x8] sm:$0xff] %v665
  %799 = vst [vmem:[%s11 + $0x10] sm:$0xff] %v666
  %800 = vst [vmem:[%s11 + $0x18] sm:$0xff] %v667
  %801 = vst [vmem:[%s11 + $0x20] sm:$0xff] %v668
  %802 = vst [vmem:[%s11 + $0x28] sm:$0xff] %v669
  %803 = vst [vmem:[%s11 + $0x30] sm:$0xff] %v670
  %804 = vst [vmem:[%s11 + $0x38] sm:$0xff] %v671
  %805 = vst [vmem:[%s11 + $0x40] sm:$0xff] %v672
  %806 = vst [vmem:[%s11 + $0x48] sm:$0xff] %v673
  %807 = vst [vmem:[%s11 + $0x50] sm:$0xff] %v674
  %808 = vst [vmem:[%s11 + $0x58] sm:$0xff] %v675
  %809 = vst [vmem:[%s11 + $0x60] sm:$0xff] %v676
  %810 = vst [vmem:[%s11 + $0x68] sm:$0xff] %v677
  %811 = vst [vmem:[%s11 + $0x70] sm:$0xff] %v678
  %812 = vst [vmem:[%s11 + $0x78] sm:$0xff] %v679
  // Predicated region
  $region42: #{gcn_forward.1} parent=0 // pred_check
    _
  $region43: #{gcn_forward.1} parent=0 // pred_check_branch
    %814 = sbr.rel (0) target = $region45
  $region44: #{gcn_forward.1} parent=0 // pred_region
    _
  $region45: #{gcn_forward.1} parent=0 // pred_fallthru
    _
  // Predicated region
  $region46: #{gcn_forward.1} parent=0 // pred_check
    _
  $region47: #{gcn_forward.1} parent=0 // pred_check_branch
    %816 = sbr.rel (0) target = $region49
  $region48: #{gcn_forward.1} parent=0 // pred_region
    _
  $region49: #{gcn_forward.1} parent=0 // pred_fallthru
    _
  // Predicated region
  $region50: #{gcn_forward.1} parent=0 // pred_check
    _
  $region51: #{gcn_forward.1} parent=0 // pred_check_branch
    %818 = sbr.rel (0) target = $region53
  $region52: #{gcn_forward.1} parent=0 // pred_region
    _
  $region53: #{gcn_forward.1} parent=0 // pred_fallthru
    _
  // Predicated region
  $region54: #{gcn_forward.1} parent=0 // pred_check
    _
  $region55: #{gcn_forward.1} parent=0 // pred_check_branch
    %820 = sbr.rel (0) target = $region57
  $region56: #{gcn_forward.1} parent=0 // pred_region
    _
  $region57: #{gcn_forward.1} parent=0 // pred_fallthru
    _

</llo_original>
